<compile_context>
chip_gen: v6e
topology: v6e:2x2x1
jax: 0.10.0
libtpu: 0.0.40
codegen_flags: <defaults>
</compile_context>

<pallas_src>
import functools
import math

import jax
import jax.numpy as jnp
from jax import lax
from jax.experimental import pallas as pl
from jax.experimental.pallas import tpu as pltpu

NEG_INF = -1e18


# --------------------------------------------------------------------------
# small helpers
# --------------------------------------------------------------------------
def _round_up(x, m):
    return ((x + m - 1) // m) * m


def _pad_to(x, shape):
    pads = [(0, t - s) for s, t in zip(x.shape, shape)]
    if any(p for _, p in pads):
        x = jnp.pad(x, pads)
    return x


def _vmem_budget_bytes():
    try:
        cap = int(pltpu.get_tpu_info().vmem_capacity_bytes)
        if cap > 0:
            # ~102 MiB on v5e/v6e (128 MiB phys), ~51 MiB on v7x (64 MiB phys)
            return (cap * 4) // 5
    except Exception:
        pass
    return 48 * 1024 * 1024  # conservative fallback, fits v7x's 64 MiB


def _prep_attn_mask(mask):
    """bool/uint8 -> int8 (1 byte/elem, masked_fill in-kernel); float -> f32 additive."""
    mask = jnp.asarray(mask)
    if jnp.issubdtype(mask.dtype, jnp.floating):
        return mask.astype(jnp.float32), True
    return (mask != 0).astype(jnp.int8), False


def _prep_row_mask(mask):
    """(B,Lq[,1]) key-padding mask; tiny, so f32 0/1 indicator is fine."""
    mask = jnp.asarray(mask)
    if jnp.issubdtype(mask.dtype, jnp.floating):
        return mask.astype(jnp.float32), True
    return (mask != 0).astype(jnp.float32), False


def _choose_tq_exact(Lq, Lk, Dk, Dv, in_bytes, attn_bytes, mask_bytes,
                     budget, requested):
    """q-tile for the exact path, accounting for resident K/V/attn/out blocks."""
    lq8 = _round_up(Lq, 8)
    fixed = 2 * Lk * (Dk + Dv) * in_bytes                 # K/V, double-buffered
    per_row = (2 * Dk * in_bytes                          # q block
               + 2 * Dv * 4                               # out block
               + 2 * Lk * attn_bytes                      # attn out block
               + 2 * Lk * mask_bytes                      # mask block
               + 4 * Lk * 4 + 32)                         # s/e/p temporaries
    avail = budget - fixed
    cap = (avail // per_row) if avail > 0 else 8
    tq = 256 if requested is None else int(requested)
    tq = max(8, min(tq, cap, lq8))
    if tq >= lq8:
        return lq8                                        # single (full) q tile
    gran = 128 if tq >= 128 else 32
    return max(32, (tq // gran) * gran)


def _choose_tq_flash(Lq, tk, Dk, Dv, in_bytes, mask_bytes, budget, requested):
    lq8 = _round_up(Lq, 8)
    fixed = 2 * tk * (Dk + Dv) * in_bytes                 # K/V tiles, dbl-buffered
    per_row = (2 * Dk * in_bytes + 2 * Dv * 4
               + 2 * tk * mask_bytes
               + 4 * tk * 4 + 2 * 4 + 32)                 # s/p temps, m/l scratch
    avail = budget - fixed
    cap = (avail // per_row) if avail > 0 else 32
    tq = 256 if requested is None else int(requested)
    tq = max(8, min(tq, cap, lq8))
    if tq >= lq8:
        return lq8
    gran = 128 if tq >= 128 else 32
    return max(32, (tq // gran) * gran)


def _choose_tk(Lk, requested):
    """Pad Lk only to a multiple of 128 and pick tk dividing it (no overshoot)."""
    desired = 512 if requested is None else max(128, (int(requested) // 128) * 128)
    if Lk <= desired:
        lkp = _round_up(Lk, 8)
        return lkp, lkp                                   # single kv tile
    lkp = _round_up(Lk, 128)
    m = lkp // 128
    for d in range(desired // 128, 0, -1):
        if m % d == 0:
            return lkp, 128 * d
    return lkp, 128


# --------------------------------------------------------------------------
# Kernel A: full keys per q tile, exact softmax, writes attention weights.
# --------------------------------------------------------------------------
def _sdpa_exact_kernel(*refs, inv_t, has_bias, bias_additive,
                       has_row, row_additive, mxu_dtype):
    it = iter(refs)
    q_ref = next(it)
    k_ref = next(it)
    v_ref = next(it)
    bias_ref = next(it) if has_bias else None
    row_ref = next(it) if has_row else None
    out_ref = next(it)
    attn_ref = next(it)

    # scale q on the small (tq, Dk) tile, then feed the MXU in bf16
    q = (q_ref[...] * inv_t).astype(mxu_dtype)
    k = k_ref[...].astype(mxu_dtype)
    s = lax.dot_general(q, k, (((1,), (1,)), ((), ())),
                        preferred_element_type=jnp.float32)      # (tq, Lk)

    if has_bias:
        if bias_additive:
            s = s + bias_ref[...]
        else:
            s = jnp.where(bias_ref[...] != 0, NEG_INF, s)        # masked_fill
    if has_row:
        if row_additive:
            s = s + row_ref[...]                                 # (tq,1) bcast
        else:
            s = jnp.where(row_ref[...] != 0, NEG_INF, s)

    m = jnp.max(s, axis=-1, keepdims=True)
    e = jnp.exp(s - m)
    denom = jnp.sum(e, axis=-1, keepdims=True)
    p = e * (1.0 / denom)                                        # exact divide

    attn_ref[...] = p.astype(attn_ref.dtype)
    out_ref[...] = jnp.dot(p.astype(mxu_dtype), v_ref[...].astype(mxu_dtype),
                           preferred_element_type=jnp.float32
                           ).astype(out_ref.dtype)


def _sdpa_exact_call(q, k, v, bias, bias_additive, row, row_additive,
                     inv_t, tq, mxu_dtype, attn_dtype, vmem_limit):
    B, Lq_p, Dk = q.shape
    Lk = k.shape[1]
    Dv = v.shape[2]
    nq = Lq_p // tq
    has_bias = bias is not None
    has_row = row is not None
    bias_batched = has_bias and bias.ndim == 3

    in_specs = [
        pl.BlockSpec((pl.Squeezed(), tq, Dk), lambda b, qi: (b, qi, 0)),
        pl.BlockSpec((pl.Squeezed(), Lk, Dk), lambda b, qi: (b, 0, 0)),
        pl.BlockSpec((pl.Squeezed(), Lk, Dv), lambda b, qi: (b, 0, 0)),
    ]
    args = [q, k, v]
    if has_bias:
        if bias_batched:
            in_specs.append(pl.BlockSpec((pl.Squeezed(), tq, Lk),
                                         lambda b, qi: (b, qi, 0)))
        else:
            in_specs.append(pl.BlockSpec((tq, Lk), lambda b, qi: (qi, 0)))
        args.append(bias)
    if has_row:
        in_specs.append(pl.BlockSpec((pl.Squeezed(), tq, 1),
                                     lambda b, qi: (b, qi, 0)))
        args.append(row)

    kernel = functools.partial(
        _sdpa_exact_kernel, inv_t=inv_t, has_bias=has_bias,
        bias_additive=bias_additive, has_row=has_row,
        row_additive=row_additive, mxu_dtype=mxu_dtype)

    return pl.pallas_call(
        kernel,
        out_shape=(jax.ShapeDtypeStruct((B, Lq_p, Dv), jnp.float32),
                   jax.ShapeDtypeStruct((B, Lq_p, Lk), attn_dtype)),
        grid_spec=pltpu.PrefetchScalarGridSpec(
            num_scalar_prefetch=0,
            grid=(B, nq),
            in_specs=in_specs,
            out_specs=[
                pl.BlockSpec((pl.Squeezed(), tq, Dv), lambda b, qi: (b, qi, 0)),
                pl.BlockSpec((pl.Squeezed(), tq, Lk), lambda b, qi: (b, qi, 0)),
            ],
        ),
        compiler_params=pltpu.CompilerParams(
            dimension_semantics=("parallel", "parallel"),
            vmem_limit_bytes=int(vmem_limit)),
    )(*args)


# --------------------------------------------------------------------------
# Kernel B: flash-style online softmax over kv tiles, output only.
# --------------------------------------------------------------------------
def _sdpa_flash_kernel(*refs, inv_t, has_bias, bias_additive,
                       has_row, row_additive, lk_rem, mxu_dtype):
    it = iter(refs)
    q_ref = next(it)
    k_ref = next(it)
    v_ref = next(it)
    bias_ref = next(it) if has_bias else None
    row_ref = next(it) if has_row else None
    out_ref = next(it)
    m_sc = next(it)
    l_sc = next(it)

    ki = pl.program_id(2)
    last = pl.num_programs(2) - 1

    @pl.when(ki == 0)
    def _init():
        m_sc[...] = jnp.full_like(m_sc, -jnp.inf)
        l_sc[...] = jnp.zeros_like(l_sc)
        out_ref[...] = jnp.zeros_like(out_ref)   # kv-resident accumulator

    q = (q_ref[...] * inv_t).astype(mxu_dtype)
    k = k_ref[...].astype(mxu_dtype)
    s = lax.dot_general(q, k, (((1,), (1,)), ((), ())),
                        preferred_element_type=jnp.float32)      # (tq, tk)

    if has_bias:
        if bias_additive:
            s = s + bias_ref[...]
        else:
            s = jnp.where(bias_ref[...] != 0, NEG_INF, s)
    if has_row:
        if row_additive:
            s = s + row_ref[...]
        else:
            s = jnp.where(row_ref[...] != 0, NEG_INF, s)

    if lk_rem:
        # only the last kv tile has zero-padded key columns; mask them there only
        def _mask_tail(x):
            col = lax.broadcasted_iota(jnp.int32, x.shape, 1)
            return jnp.where(col >= lk_rem, -jnp.inf, x)
        s = lax.cond(ki == last, _mask_tail, lambda x: x, s)

    m_prev = m_sc[...]
    m_new = jnp.maximum(m_prev, jnp.max(s, axis=-1, keepdims=True))
    alpha = jnp.exp(m_prev - m_new)
    p = jnp.exp(s - m_new)
    l_sc[...] = alpha * l_sc[...] + jnp.sum(p, axis=-1, keepdims=True)
    out_ref[...] = alpha * out_ref[...] + jnp.dot(
        p.astype(mxu_dtype), v_ref[...].astype(mxu_dtype),
        preferred_element_type=jnp.float32)
    m_sc[...] = m_new

    @pl.when(ki == last)
    def _finish():
        out_ref[...] = out_ref[...] * (1.0 / l_sc[...])          # exact divide


def _sdpa_flash_call(q, k, v, bias, bias_additive, row, row_additive,
                     inv_t, tq, tk, lk_rem, mxu_dtype, vmem_limit, kv_buffers):
    B, Lq_p, Dk = q.shape
    Lk_p = k.shape[1]
    Dv = v.shape[2]
    nq = Lq_p // tq
    nk = Lk_p // tk
    has_bias = bias is not None
    has_row = row is not None
    bias_batched = has_bias and bias.ndim == 3

    def kv_spec(block, imap):
        if kv_buffers and int(kv_buffers) > 2:
            return pl.BlockSpec(block, imap,
                                pipeline_mode=pl.Buffered(int(kv_buffers)))
        return pl.BlockSpec(block, imap)

    in_specs = [
        pl.BlockSpec((pl.Squeezed(), tq, Dk), lambda b, qi, ki: (b, qi, 0)),
        kv_spec((pl.Squeezed(), tk, Dk), lambda b, qi, ki: (b, ki, 0)),
        kv_spec((pl.Squeezed(), tk, Dv), lambda b, qi, ki: (b, ki, 0)),
    ]
    args = [q, k, v]
    if has_bias:
        if bias_batched:
            in_specs.append(pl.BlockSpec((pl.Squeezed(), tq, tk),
                                         lambda b, qi, ki: (b, qi, ki)))
        else:
            in_specs.append(pl.BlockSpec((tq, tk), lambda b, qi, ki: (qi, ki)))
        args.append(bias)
    if has_row:
        in_specs.append(pl.BlockSpec((pl.Squeezed(), tq, 1),
                                     lambda b, qi, ki: (b, qi, 0)))
        args.append(row)

    kernel = functools.partial(
        _sdpa_flash_kernel, inv_t=inv_t, has_bias=has_bias,
        bias_additive=bias_additive, has_row=has_row,
        row_additive=row_additive, lk_rem=lk_rem, mxu_dtype=mxu_dtype)

    return pl.pallas_call(
        kernel,
        out_shape=jax.ShapeDtypeStruct((B, Lq_p, Dv), jnp.float32),
        grid_spec=pltpu.PrefetchScalarGridSpec(
            num_scalar_prefetch=0,
            grid=(B, nq, nk),
            in_specs=in_specs,
            out_specs=pl.BlockSpec((pl.Squeezed(), tq, Dv),
                                   lambda b, qi, ki: (b, qi, 0)),
            scratch_shapes=[pltpu.VMEM((tq, 1), jnp.float32),
                            pltpu.VMEM((tq, 1), jnp.float32)],
        ),
        compiler_params=pltpu.CompilerParams(
            dimension_semantics=("parallel", "parallel", "arbitrary"),
            vmem_limit_bytes=int(vmem_limit)),
    )(*args)


# --------------------------------------------------------------------------
# Public wrapper (eval-mode forward of ScaledDotProductAttention)
# --------------------------------------------------------------------------
def scaled_dot_product_attention(q, k, v, key_padding_mask=None, attn_mask=None,
                                 temperature=None, return_attn=True,
                                 block_q=None, block_k=None,
                                 mxu_dtype=jnp.bfloat16,
                                 attn_dtype=jnp.float32,
                                 kv_buffers=2):
    """q:(B,Lq,Dk) k:(B,Lk,Dk) v:(B,Lk,Dv).

    attn_mask: (Lq,Lk) or (B,Lq,Lk); bool/uint8 nonzero = masked (masked_fill),
               float = additive bias. key_padding_mask: (B,Lq) or (B,Lq,1), same
               conventions (pad_is_first=False semantics).
    Returns (output, attn) if return_attn else (output, None).
    """
    q = jnp.asarray(q)
    k = jnp.asarray(k)
    v = jnp.asarray(v)
    B, Lq, Dk = q.shape
    Lk = k.shape[1]
    Dv = v.shape[2]
    if temperature is None:
        temperature = math.sqrt(Dk)
    inv_t = 1.0 / float(temperature)

    bias, bias_additive = (None, False)
    if attn_mask is not None:
        bias, bias_additive = _prep_attn_mask(attn_mask)
        assert bias.shape in ((Lq, Lk), (B, Lq, Lk))
    row, row_additive = (None, False)
    if key_padding_mask is not None:
        row, row_additive = _prep_row_mask(key_padding_mask)
        if row.ndim == 2:
            row = row[:, :, None]
        assert row.shape == (B, Lq, 1)

    in_bytes = q.dtype.itemsize
    mask_bytes = 0 if bias is None else bias.dtype.itemsize
    attn_bytes = jnp.dtype(attn_dtype).itemsize
    budget = _vmem_budget_bytes()

    if return_attn:
        tq = _choose_tq_exact(Lq, Lk, Dk, Dv, in_bytes, attn_bytes, mask_bytes,
                              budget, block_q)
        Lq_p = _round_up(Lq, tq)
        qp = _pad_to(q, (B, Lq_p, Dk))                 # no Dk/Dv/Lk padding
        bp = None
        if bias is not None:
            bp = _pad_to(bias, (Lq_p, Lk) if bias.ndim == 2 else (B, Lq_p, Lk))
        rp = _pad_to(row, (B, Lq_p, 1)) if row is not None else None
        out, attn = _sdpa_exact_call(qp, k, v, bp, bias_additive, rp,
                                     row_additive, inv_t, tq, mxu_dtype,
                                     attn_dtype, budget)
        return out[:, :Lq, :], attn[:, :Lq, :]

    # flash path (output only, large-Lk friendly)
    Lk_p, tk = _choose_tk(Lk, block_k)
    nk = Lk_p // tk
    lk_rem = 0 if Lk_p == Lk else Lk - (nk - 1) * tk
    tq = _choose_tq_flash(Lq, tk, Dk, Dv, in_bytes, mask_bytes, budget, block_q)
    Lq_p = _round_up(Lq, tq)

    qp = _pad_to(q, (B, Lq_p, Dk))
    kp = _pad_to(k, (B, Lk_p, Dk))
    vp = _pad_to(v, (B, Lk_p, Dv))
    bp = None
    if bias is not None:
        bp = _pad_to(bias, (Lq_p, Lk_p) if bias.ndim == 2 else (B, Lq_p, Lk_p))
    rp = _pad_to(row, (B, Lq_p, 1)) if row is not None else None

    out = _sdpa_flash_call(qp, kp, vp, bp, bias_additive, rp, row_additive,
                           inv_t, tq, tk, lk_rem, mxu_dtype, budget, kv_buffers)
    return out[:, :Lq, :], None


# --------------------------------------------------------------------------
# Pure-JAX reference (faithful port of the torch forward, eval mode)
# --------------------------------------------------------------------------
def _reference(q, k, v, key_padding_mask, attn_mask, temperature):
    attn = jnp.einsum("bqd,bkd->bqk", q, k) / temperature
    if attn_mask is not None:
        am = jnp.asarray(attn_mask)
        if am.ndim == 2:
            am = am[None]
        if jnp.issubdtype(am.dtype, jnp.floating):
            attn = attn + am.astype(attn.dtype)
        else:
            attn = jnp.where(am != 0, NEG_INF, attn)
    if key_padding_mask is not None:
        kpm = jnp.asarray(key_padding_mask)
        if kpm.ndim == 2:
            kpm = kpm[:, :, None]
        if jnp.issubdtype(kpm.dtype, jnp.floating):
            attn = attn + kpm.astype(attn.dtype)
        else:
            attn = jnp.where(kpm != 0, NEG_INF, attn)
    attn = jax.nn.softmax(attn, axis=-1)
    return jnp.einsum("bqk,bkd->bqd", attn, v), attn


def _check(name, got, want, atol, rtol):
    got = jnp.asarray(got, jnp.float32)
    want = jnp.asarray(want, jnp.float32)
    if not bool(jnp.allclose(got, want, atol=atol, rtol=rtol)):
        err = float(jnp.max(jnp.abs(got - want)))
        raise AssertionError(f"{name}: max abs err {err} (atol={atol}, rtol={rtol})")


if __name__ == "__main__":
    def run_case(name, B, Lq, Lk, Dk, Dv, mask_mode, use_kpm, block_q, block_k,
                 mxu_dtype, tol, seed):
        kq, kk, kv = jax.random.split(seed, 3)
        q = jax.random.normal(kq, (B, Lq, Dk), jnp.float32)
        k = jax.random.normal(kk, (B, Lk, Dk), jnp.float32)
        v = jax.random.normal(kv, (B, Lk, Dv), jnp.float32)

        if mask_mode == "2d_bool":
            am = jnp.triu(jnp.ones((Lq, Lk), dtype=bool), k=1)
        elif mask_mode == "3d_bool":
            base = jnp.triu(jnp.ones((Lq, Lk), dtype=bool), k=1)
            am = jnp.broadcast_to(base[None], (B, Lq, Lk))
            am = am.at[1, :, -5:].set(True)           # batch-dependent extra mask
        elif mask_mode == "2d_float":
            causal = jnp.triu(jnp.ones((Lq, Lk), dtype=bool), k=1)
            am = jnp.where(causal, jnp.float32(NEG_INF), jnp.float32(0.0))
        else:
            am = None
        kpm = None
        if use_kpm:
            kpm = jnp.zeros((B, Lq), dtype=bool)
            kpm = kpm.at[0, -2:].set(True).at[1, -1:].set(True)

        temp = math.sqrt(Dk)
        ref_out, ref_attn = _reference(q, k, v, kpm, am, temp)

        out, attn = scaled_dot_product_attention(
            q, k, v, key_padding_mask=kpm, attn_mask=am, temperature=temp,
            return_attn=True, block_q=block_q, block_k=block_k,
            mxu_dtype=mxu_dtype)
        jax.block_until_ready((out, attn))
        _check(f"{name}:output(exact)", out, ref_out, tol, tol)
        _check(f"{name}:attn(exact)", attn, ref_attn, tol, tol)

        out2, _ = scaled_dot_product_attention(
            q, k, v, key_padding_mask=kpm, attn_mask=am, temperature=temp,
            return_attn=False, block_q=block_q, block_k=block_k,
            mxu_dtype=mxu_dtype)
        jax.block_until_ready(out2)
        _check(f"{name}:output(flash)", out2, ref_out, tol, tol)

    key = jax.random.PRNGKey(0)
    k1, k2, k3, k4 = jax.random.split(key, 4)
    # bf16 MXU path tolerance: bf16 input rounding on the two matmuls.
    BF16_TOL = 2e-2

    # case 1: small shapes, shared 2D bool causal mask + key-padding mask.
    run_case("c1", 2, 8, 8, 32, 32, "2d_bool", True, None, None,
             jnp.bfloat16, BF16_TOL, k1)
    # case 2: batched 3D bool mask + kpm; multi kv-tile online softmax with a
    #         ragged (64-column) last key tile (Lk=320 padded to 384, tk=128).
    run_case("c2", 2, 24, 320, 32, 48, "3d_bool", True, None, 128,
             jnp.bfloat16, BF16_TOL, k2)
    # case 3: no masks (bias-free path); Lk=200 padded to 256 -> lk_rem masking
    #         is load-bearing here (unmasked zero keys would corrupt the result).
    run_case("c3", 2, 16, 200, 64, 32, None, False, None, 128,
             jnp.bfloat16, BF16_TOL, k3)
    # case 4: float additive mask + f32 MXU path.
    run_case("c4", 2, 8, 8, 32, 32, "2d_float", False, None, None,
             jnp.float32, BF16_TOL, k4)

    print("KERNEL_OK")
</pallas_src>

<mosaic_0001>
module attributes {stable_mosaic.version = 11 : i64} {
  func.func @_sdpa_exact_kernel(%arg0: i32, %arg1: i32, %arg2: memref<1x8x32xf32, #tpu.memory_space<vmem>>, %arg3: memref<1x8x32xf32, #tpu.memory_space<vmem>>, %arg4: memref<1x8x32xf32, #tpu.memory_space<vmem>>, %arg5: memref<8x8xi8, #tpu.memory_space<vmem>>, %arg6: memref<1x8x1xf32, #tpu.memory_space<vmem>>, %arg7: memref<1x8x32xf32, #tpu.memory_space<vmem>>, %arg8: memref<1x8x8xf32, #tpu.memory_space<vmem>>) attributes {dimension_semantics = [#tpu.dimension_semantics<parallel>, #tpu.dimension_semantics<parallel>], iteration_bounds = array<i64: 2, 1>, scalar_prefetch = 0 : i64, scratch_operands = 0 : i64, tpu.core_type = #tpu.core_type<tc>, window_params = [{transform_indices = @transform_0, window_bounds = array<i64: 1, 8, 32>}, {transform_indices = @transform_1, window_bounds = array<i64: 1, 8, 32>}, {transform_indices = @transform_2, window_bounds = array<i64: 1, 8, 32>}, {transform_indices = @transform_3, window_bounds = array<i64: 8, 8>}, {transform_indices = @transform_4, window_bounds = array<i64: 1, 8, 1>}, {transform_indices = @transform_5, window_bounds = array<i64: 1, 8, 32>}, {transform_indices = @transform_6, window_bounds = array<i64: 1, 8, 8>}]} {
    %c0 = arith.constant 0 : index
    %c0_0 = arith.constant 0 : index
    %c0_1 = arith.constant 0 : index
    %0 = vector.load %arg2[%c0, %c0_0, %c0_1] : memref<1x8x32xf32, #tpu.memory_space<vmem>>, vector<1x8x32xf32>
    %1 = vector.shape_cast %0 : vector<1x8x32xf32> to vector<8x32xf32>
    %cst = arith.constant 0.176776692 : f32
    %2 = vector.broadcast %cst : f32 to vector<8x32xf32>
    %3 = arith.mulf %1, %2 : vector<8x32xf32>
    %4 = arith.truncf %3 : vector<8x32xf32> to vector<8x32xbf16>
    %c0_2 = arith.constant 0 : index
    %c0_3 = arith.constant 0 : index
    %c0_4 = arith.constant 0 : index
    %5 = vector.load %arg3[%c0_2, %c0_3, %c0_4] : memref<1x8x32xf32, #tpu.memory_space<vmem>>, vector<1x8x32xf32>
    %6 = vector.shape_cast %5 : vector<1x8x32xf32> to vector<8x32xf32>
    %7 = arith.truncf %6 : vector<8x32xf32> to vector<8x32xbf16>
    %cst_5 = arith.constant dense<0.000000e+00> : vector<8x8xf32>
    %8 = tpu.matmul %4, %7, %cst_5 {dimension_numbers = #tpu.dot_dimension_numbers<[1], [1], [0], [0], [0, 0, 1, 0], [], []>} : vector<8x32xbf16>, vector<8x32xbf16>, vector<8x8xf32> -> vector<8x8xf32>
    %c0_6 = arith.constant 0 : index
    %c0_7 = arith.constant 0 : index
    %9 = vector.load %arg5[%c0_6, %c0_7] : memref<8x8xi8, #tpu.memory_space<vmem>>, vector<8x8xi8>
    %c0_i8 = arith.constant 0 : i8
    %10 = vector.broadcast %c0_i8 : i8 to vector<8x8xi8>
    %11 = arith.cmpi ne, %9, %10 : vector<8x8xi8>
    %cst_8 = arith.constant -9.99999984E+17 : f32
    %12 = vector.broadcast %cst_8 : f32 to vector<8x8xf32>
    %13 = arith.select %11, %12, %8 : vector<8x8xi1>, vector<8x8xf32>
    %c0_9 = arith.constant 0 : index
    %c0_10 = arith.constant 0 : index
    %c0_11 = arith.constant 0 : index
    %14 = vector.load %arg6[%c0_9, %c0_10, %c0_11] : memref<1x8x1xf32, #tpu.memory_space<vmem>>, vector<1x8x1xf32>
    %15 = vector.shape_cast %14 : vector<1x8x1xf32> to vector<8x1xf32>
    %cst_12 = arith.constant 0.000000e+00 : f32
    %16 = vector.broadcast %cst_12 : f32 to vector<8x1xf32>
    %17 = arith.cmpf one, %15, %16 : vector<8x1xf32>
    %cst_13 = arith.constant -9.99999984E+17 : f32
    %18 = vector.shape_cast %17 : vector<8x1xi1> to vector<8x1xi1>
    %19 = vector.broadcast %18 : vector<8x1xi1> to vector<8x8xi1>
    %20 = vector.broadcast %cst_13 : f32 to vector<8x8xf32>
    %21 = arith.select %19, %20, %13 : vector<8x8xi1>, vector<8x8xf32>
    %cst_14 = arith.constant dense<0xFF800000> : vector<8xf32>
    %22 = vector.multi_reduction <maximumf>, %21, %cst_14 [1] : vector<8x8xf32> to vector<8xf32>
    %23 = vector.shape_cast %22 : vector<8xf32> to vector<8x1xf32>
    %24 = vector.broadcast %23 : vector<8x1xf32> to vector<8x8xf32>
    %25 = arith.subf %21, %24 : vector<8x8xf32>
    %26 = math.exp %25 : vector<8x8xf32>
    %cst_15 = arith.constant dense<0.000000e+00> : vector<8xf32>
    %27 = vector.multi_reduction <add>, %26, %cst_15 [1] : vector<8x8xf32> to vector<8xf32>
    %28 = vector.shape_cast %27 : vector<8xf32> to vector<8x1xf32>
    %cst_16 = arith.constant 1.000000e+00 : f32
    %29 = vector.broadcast %cst_16 : f32 to vector<8x1xf32>
    %30 = arith.divf %29, %28 : vector<8x1xf32>
    %31 = vector.broadcast %30 : vector<8x1xf32> to vector<8x8xf32>
    %32 = arith.mulf %26, %31 : vector<8x8xf32>
    %c0_17 = arith.constant 0 : index
    %c0_18 = arith.constant 0 : index
    %c0_19 = arith.constant 0 : index
    %33 = vector.load %arg8[%c0_17, %c0_18, %c0_19] : memref<1x8x8xf32, #tpu.memory_space<vmem>>, vector<1x8x8xf32>
    %34 = vector.shape_cast %33 : vector<1x8x8xf32> to vector<8x8xf32>
    %35 = vector.shape_cast %32 : vector<8x8xf32> to vector<1x8x8xf32>
    tpu.vector_store %arg8[%c0_17, %c0_18, %c0_19], %35 {strides = array<i32>} : memref<1x8x8xf32, #tpu.memory_space<vmem>>, vector<1x8x8xf32>,
    %36 = arith.truncf %32 : vector<8x8xf32> to vector<8x8xbf16>
    %c0_20 = arith.constant 0 : index
    %c0_21 = arith.constant 0 : index
    %c0_22 = arith.constant 0 : index
    %37 = vector.load %arg4[%c0_20, %c0_21, %c0_22] : memref<1x8x32xf32, #tpu.memory_space<vmem>>, vector<1x8x32xf32>
    %38 = vector.shape_cast %37 : vector<1x8x32xf32> to vector<8x32xf32>
    %39 = arith.truncf %38 : vector<8x32xf32> to vector<8x32xbf16>
    %cst_23 = arith.constant dense<0.000000e+00> : vector<8x32xf32>
    %40 = tpu.matmul %36, %39, %cst_23 {dimension_numbers = #tpu.dot_dimension_numbers<[1], [0], [0], [1], [0, 0, 1, 1], [], []>} : vector<8x8xbf16>, vector<8x32xbf16>, vector<8x32xf32> -> vector<8x32xf32>
    %c0_24 = arith.constant 0 : index
    %c0_25 = arith.constant 0 : index
    %c0_26 = arith.constant 0 : index
    %41 = vector.load %arg7[%c0_24, %c0_25, %c0_26] : memref<1x8x32xf32, #tpu.memory_space<vmem>>, vector<1x8x32xf32>
    %42 = vector.shape_cast %41 : vector<1x8x32xf32> to vector<8x32xf32>
    %43 = vector.shape_cast %40 : vector<8x32xf32> to vector<1x8x32xf32>
    tpu.vector_store %arg7[%c0_24, %c0_25, %c0_26], %43 {strides = array<i32>} : memref<1x8x32xf32, #tpu.memory_space<vmem>>, vector<1x8x32xf32>,
    return
  }
  func.func @transform_0(%arg0: i32, %arg1: i32) -> (i32, i32, i32) {
    %c0_i32 = arith.constant 0 : i32
    %c0_i32_0 = arith.constant 0 : i32
    return %arg0, %arg1, %c0_i32 : i32, i32, i32
  }
  func.func @transform_1(%arg0: i32, %arg1: i32) -> (i32, i32, i32) {
    %c0_i32 = arith.constant 0 : i32
    %c0_i32_0 = arith.constant 0 : i32
    %c0_i32_1 = arith.constant 0 : i32
    return %arg0, %c0_i32, %c0_i32_0 : i32, i32, i32
  }
  func.func @transform_2(%arg0: i32, %arg1: i32) -> (i32, i32, i32) {
    %c0_i32 = arith.constant 0 : i32
    %c0_i32_0 = arith.constant 0 : i32
    %c0_i32_1 = arith.constant 0 : i32
    return %arg0, %c0_i32, %c0_i32_0 : i32, i32, i32
  }
  func.func @transform_3(%arg0: i32, %arg1: i32) -> (i32, i32) {
    %c0_i32 = arith.constant 0 : i32
    %c0_i32_0 = arith.constant 0 : i32
    return %arg1, %c0_i32 : i32, i32
  }
  func.func @transform_4(%arg0: i32, %arg1: i32) -> (i32, i32, i32) {
    %c0_i32 = arith.constant 0 : i32
    %c0_i32_0 = arith.constant 0 : i32
    return %arg0, %arg1, %c0_i32 : i32, i32, i32
  }
  func.func @transform_5(%arg0: i32, %arg1: i32) -> (i32, i32, i32) {
    %c0_i32 = arith.constant 0 : i32
    %c0_i32_0 = arith.constant 0 : i32
    return %arg0, %arg1, %c0_i32 : i32, i32, i32
  }
  func.func @transform_6(%arg0: i32, %arg1: i32) -> (i32, i32, i32) {
    %c0_i32 = arith.constant 0 : i32
    %c0_i32_0 = arith.constant 0 : i32
    return %arg0, %arg1, %c0_i32 : i32, i32, i32
  }
}

</mosaic_0001>

<llo_original>
// kernel: tpu_custom_call.1
$region0: #{tpu_custom_call.1}
  #allocation0 [shape = 'u32[]', space=smem, size = 0x4, offset = 0x4, fixed_abs, tag = 'smem constant byte address 0x4 - core index']
  #allocation1 [shape = 'u32[144,128]{1,0:T(1,128)}', space=vmem, size = 0x12000, scoped, tag = 'internal scratch']
  %s0 = inlined_call_operand.vmem [shape: f32[2,8,32], index: 0, kind: input, shape index: {}]
  %s1 = inlined_call_operand.hbm [shape: f32[2,8,32], index: 1, kind: input, shape index: {}]
  %s2 = inlined_call_operand.hbm [shape: f32[2,8,32], index: 2, kind: input, shape index: {}]
  %s3 = inlined_call_operand.vmem [shape: s8[8,8], index: 3, kind: input, shape index: {}]
  %s4 = inlined_call_operand.vmem [shape: f32[2,8,1], index: 4, kind: input, shape index: {}]
  %s5 = inlined_call_operand.hbm [shape: f32[2,8,32], index: 5, kind: output, shape index: {0}]
  %s6 = inlined_call_operand.hbm [shape: f32[2,8,8], index: 6, kind: output, shape index: {1}]
  %7 = xla_tuple %s5, %s6
  %s8 = sld [smem:[#allocation0]]
  $region69: #{tpu_custom_call.1} parent=0
    _
  %s10 = ssub.s32 1, %s8
  %s11 = scalar_select 0, %s10, %s8
  $region1: #{tpu_custom_call.1} parent=0
    #allocation2 [shape = 'u8[8192]{0}', space=vmem, size = 0x2000, scoped, tag = 'input window, operand 1']
    #allocation3 [shape = 's32[2]{0}', space=sflag, size = 0x8, scoped, tag = 'scoped memory for tpu_custom_call.1']
    #allocation4 [shape = 's32[2]{0}', space=sflag, size = 0x8, scoped, tag = 'scoped memory for tpu_custom_call.1']
    #allocation5 [shape = 'u8[8192]{0}', space=vmem, size = 0x2000, scoped, tag = 'input window, operand 2']
    #allocation6 [shape = 's32[2]{0}', space=sflag, size = 0x8, scoped, tag = 'scoped memory for tpu_custom_call.1']
    #allocation7 [shape = 'u8[8192]{0}', space=vmem, size = 0x2000, scoped, tag = 'output window, operand 0']
    #allocation8 [shape = 'u8[8192]{0}', space=vmem, size = 0x2000, scoped, tag = 'output window, operand 1']
    #allocation9 [shape = 's32[2]{0}', space=sflag, size = 0x8, scoped, tag = 'scoped memory for tpu_custom_call.1']
    %12 = vsyncpa [#allocation3], 0
    %s13 = scalar_lea.sflag [#allocation3], 1
    %14 = vsyncpa %s13, 0
    %15 = vsyncpa [#allocation6], 0
    %s16 = scalar_lea.sflag [#allocation6], 1
    %17 = vsyncpa %s16, 0
    %18 = vsyncpa [#allocation4], 0
    %s19 = scalar_lea.sflag [#allocation4], 1
    %20 = vsyncpa %s19, 0
    %21 = vsyncpa [#allocation9], 0
    %s22 = scalar_lea.sflag [#allocation9], 1
    %23 = vsyncpa %s22, 0
    loop: start=0, step=1, limit=4
    $region2: #{tpu_custom_call.1} parent=1 // loop_pre_header
      _
    $region3: #{tpu_custom_call.1} parent=1 // loop_header
      %s25 = sphi 0, %s29
      %p26 = scmp.ge.s32.totalorder %s25, 4
      %s32 = sphi 0, %s44
      %s33 = sphi 0, %s40
      %s34 = sphi 0, %s32
      %s35 = sphi 0, %s33
      %s36 = sphi 0, %s34
      %s37 = sphi 0, %s35
      %s49 = sphi 0, %s51
      %s52 = sphi 0, %s49
      %s53 = sphi 0, %s52
      %s69 = sphi 0, %s53
      %s75 = sphi 0, %s77
      %s78 = sphi 0, %s75
      %s79 = sphi 0, %s78
      %s95 = sphi 0, %s79
      %s101 = sphi 0, %s103
      %s104 = sphi 0, %s101
      %s105 = sphi 0, %s104
      %s121 = sphi 0, %s105
      %s127 = sphi 0, %s129
      %s130 = sphi 0, %s127
      %s131 = sphi 0, %s130
      %s147 = sphi 0, %s131
      %s155 = sphi 0, %s157
      %s158 = sphi 0, %s155
      %s159 = sphi 0, %s158
      %s175 = sphi 0, %s159
      %s183 = sphi 0, %s185
      %s186 = sphi 0, %s183
      %s187 = sphi 0, %s186
      %s203 = sphi 0, %s187
      %s211 = sphi 0, %s213
      %s214 = sphi 0, %s211
      %s215 = sphi 0, %s214
      %s231 = sphi 0, %s215
    $region4: #{tpu_custom_call.1} parent=1 // loop_header_branch
      %28 = sbr.rel (%p26) target = $region8
    $region5: #{tpu_custom_call.1} parent=1 // loop_body
      %s30 = ssub.s32 %s25, 1
      %s31 = ssub.s32 %s25, 2
      %s38 = sadd.s32 1, %s33
      %p39 = scmp.ge.s32.totalorder %s38, 1
      %s40 = scalar_select %p39, 0, %s38
      %s41 = sadd.s32 1, %s32
      %s42 = scalar_select %p39, %s41, %s32
      %p43 = scmp.ge.s32.totalorder %s42, 2
      %s44 = scalar_select %p43, 0, %s42
      %s45 = ssub.s32 %s32, %s44
      %s46 = ssub.s32 %s33, %s40
      %s47 = sor.u32 %s45, %s46
      %p48 = scmp.eq.s32.totalorder %s47, 0
      %s50 = sadd.s32 %s49, 1
      %s51 = scalar_select %p48, %s49, %s50
      %p54 = pneg %p48
      %p55 = scmp.eq.s32.totalorder %s25, 1
      %p56 = por %p54, %p55
      %p57 = scmp.ne.s32.totalorder %s49, %s52
      %p58 = scmp.eq.s32.totalorder %s25, 0
      %p59 = por %p57, %p58
      %p60 = scmp.ne.s32.totalorder %s49, %s52
      %p61 = scmp.eq.s32.totalorder %s30, 1
      %p62 = por %p60, %p61
      %p63 = scmp.ne.s32.totalorder %s52, %s53
      %p64 = scmp.eq.s32.totalorder %s30, 0
      %p65 = por %p63, %p64
      %p66 = scmp.ne.s32.totalorder %s52, %s53
      %p67 = scmp.eq.s32.totalorder %s31, 1
      %p68 = por %p66, %p67
      %p70 = scmp.ne.s32.totalorder %s53, %s69
      %p71 = scmp.eq.s32.totalorder %s31, 0
      %p72 = por %p70, %p71
      %s73 = ssub.s32 %s32, %s44
      %p74 = scmp.eq.s32.totalorder %s73, 0
      %s76 = sadd.s32 %s75, 1
      %s77 = scalar_select %p74, %s75, %s76
      %p80 = pneg %p74
      %p81 = scmp.eq.s32.totalorder %s25, 1
      %p82 = por %p80, %p81
      %p83 = scmp.ne.s32.totalorder %s75, %s78
      %p84 = scmp.eq.s32.totalorder %s25, 0
      %p85 = por %p83, %p84
      %p86 = scmp.ne.s32.totalorder %s75, %s78
      %p87 = scmp.eq.s32.totalorder %s30, 1
      %p88 = por %p86, %p87
      %p89 = scmp.ne.s32.totalorder %s78, %s79
      %p90 = scmp.eq.s32.totalorder %s30, 0
      %p91 = por %p89, %p90
      %p92 = scmp.ne.s32.totalorder %s78, %s79
      %p93 = scmp.eq.s32.totalorder %s31, 1
      %p94 = por %p92, %p93
      %p96 = scmp.ne.s32.totalorder %s79, %s95
      %p97 = scmp.eq.s32.totalorder %s31, 0
      %p98 = por %p96, %p97
      %s99 = ssub.s32 %s32, %s44
      %p100 = scmp.eq.s32.totalorder %s99, 0
      %s102 = sadd.s32 %s101, 1
      %s103 = scalar_select %p100, %s101, %s102
      %p106 = pneg %p100
      %p107 = scmp.eq.s32.totalorder %s25, 1
      %p108 = por %p106, %p107
      %p109 = scmp.ne.s32.totalorder %s101, %s104
      %p110 = scmp.eq.s32.totalorder %s25, 0
      %p111 = por %p109, %p110
      %p112 = scmp.ne.s32.totalorder %s101, %s104
      %p113 = scmp.eq.s32.totalorder %s30, 1
      %p114 = por %p112, %p113
      %p115 = scmp.ne.s32.totalorder %s104, %s105
      %p116 = scmp.eq.s32.totalorder %s30, 0
      %p117 = por %p115, %p116
      %p118 = scmp.ne.s32.totalorder %s104, %s105
      %p119 = scmp.eq.s32.totalorder %s31, 1
      %p120 = por %p118, %p119
      %p122 = scmp.ne.s32.totalorder %s105, %s121
      %p123 = scmp.eq.s32.totalorder %s31, 0
      %p124 = por %p122, %p123
      %s125 = ssub.s32 %s33, %s40
      %p126 = scmp.eq.s32.totalorder %s125, 0
      %s128 = sadd.s32 %s127, 1
      %s129 = scalar_select %p126, %s127, %s128
      %p132 = pneg %p126
      %p133 = scmp.eq.s32.totalorder %s25, 1
      %p134 = por %p132, %p133
      %p135 = scmp.ne.s32.totalorder %s127, %s130
      %p136 = scmp.eq.s32.totalorder %s25, 0
      %p137 = por %p135, %p136
      %p138 = scmp.ne.s32.totalorder %s127, %s130
      %p139 = scmp.eq.s32.totalorder %s30, 1
      %p140 = por %p138, %p139
      %p141 = scmp.ne.s32.totalorder %s130, %s131
      %p142 = scmp.eq.s32.totalorder %s30, 0
      %p143 = por %p141, %p142
      %p144 = scmp.ne.s32.totalorder %s130, %s131
      %p145 = scmp.eq.s32.totalorder %s31, 1
      %p146 = por %p144, %p145
      %p148 = scmp.ne.s32.totalorder %s131, %s147
      %p149 = scmp.eq.s32.totalorder %s31, 0
      %p150 = por %p148, %p149
      %s151 = ssub.s32 %s32, %s44
      %s152 = ssub.s32 %s33, %s40
      %s153 = sor.u32 %s151, %s152
      %p154 = scmp.eq.s32.totalorder %s153, 0
      %s156 = sadd.s32 %s155, 1
      %s157 = scalar_select %p154, %s155, %s156
      %p160 = pneg %p154
      %p161 = scmp.eq.s32.totalorder %s25, 1
      %p162 = por %p160, %p161
      %p163 = scmp.ne.s32.totalorder %s155, %s158
      %p164 = scmp.eq.s32.totalorder %s25, 0
      %p165 = por %p163, %p164
      %p166 = scmp.ne.s32.totalorder %s155, %s158
      %p167 = scmp.eq.s32.totalorder %s30, 1
      %p168 = por %p166, %p167
      %p169 = scmp.ne.s32.totalorder %s158, %s159
      %p170 = scmp.eq.s32.totalorder %s30, 0
      %p171 = por %p169, %p170
      %p172 = scmp.ne.s32.totalorder %s158, %s159
      %p173 = scmp.eq.s32.totalorder %s31, 1
      %p174 = por %p172, %p173
      %p176 = scmp.ne.s32.totalorder %s159, %s175
      %p177 = scmp.eq.s32.totalorder %s31, 0
      %p178 = por %p176, %p177
      %s179 = ssub.s32 %s32, %s44
      %s180 = ssub.s32 %s33, %s40
      %s181 = sor.u32 %s179, %s180
      %p182 = scmp.eq.s32.totalorder %s181, 0
      %s184 = sadd.s32 %s183, 1
      %s185 = scalar_select %p182, %s183, %s184
      %p188 = pneg %p182
      %p189 = scmp.eq.s32.totalorder %s25, 1
      %p190 = por %p188, %p189
      %p191 = scmp.ne.s32.totalorder %s183, %s186
      %p192 = scmp.eq.s32.totalorder %s25, 0
      %p193 = por %p191, %p192
      %p194 = scmp.ne.s32.totalorder %s183, %s186
      %p195 = scmp.eq.s32.totalorder %s30, 1
      %p196 = por %p194, %p195
      %p197 = scmp.ne.s32.totalorder %s186, %s187
      %p198 = scmp.eq.s32.totalorder %s30, 0
      %p199 = por %p197, %p198
      %p200 = scmp.ne.s32.totalorder %s186, %s187
      %p201 = scmp.eq.s32.totalorder %s31, 1
      %p202 = por %p200, %p201
      %p204 = scmp.ne.s32.totalorder %s187, %s203
      %p205 = scmp.eq.s32.totalorder %s31, 0
      %p206 = por %p204, %p205
      %s207 = ssub.s32 %s32, %s44
      %s208 = ssub.s32 %s33, %s40
      %s209 = sor.u32 %s207, %s208
      %p210 = scmp.eq.s32.totalorder %s209, 0
      %s212 = sadd.s32 %s211, 1
      %s213 = scalar_select %p210, %s211, %s212
      %p216 = pneg %p210
      %p217 = scmp.eq.s32.totalorder %s25, 1
      %p218 = por %p216, %p217
      %p219 = scmp.ne.s32.totalorder %s211, %s214
      %p220 = scmp.eq.s32.totalorder %s25, 0
      %p221 = por %p219, %p220
      %p222 = scmp.ne.s32.totalorder %s211, %s214
      %p223 = scmp.eq.s32.totalorder %s30, 1
      %p224 = por %p222, %p223
      %p225 = scmp.ne.s32.totalorder %s214, %s215
      %p226 = scmp.eq.s32.totalorder %s30, 0
      %p227 = por %p225, %p226
      %p228 = scmp.ne.s32.totalorder %s214, %s215
      %p229 = scmp.eq.s32.totalorder %s31, 1
      %p230 = por %p228, %p229
      %p232 = scmp.ne.s32.totalorder %s215, %s231
      %p233 = scmp.eq.s32.totalorder %s31, 0
      %p234 = por %p232, %p233
      %p235 = scmp.le.s32.totalorder 1, %s25
      %p236 = scmp.lt.s32.totalorder %s25, 3
      %p237 = pnand %p235, %p236
      %p238 = pneg %p237
      // Predicated region
      $region9: #{tpu_custom_call.1} parent=5 // pred_check
        _
      $region10: #{tpu_custom_call.1} parent=5 // pred_check_branch
        %240 = sbr.rel (%p237) target = $region12
      $region11: #{tpu_custom_call.1} parent=5 // pred_region
        %s241 = ssub.s32 %s25, 1
        // Predicated region
        $region13: #{tpu_custom_call.1} parent=11 // pred_check
          %p242 = pneg %p143
        $region14: #{tpu_custom_call.1} parent=11 // pred_check_branch
          %244 = sbr.rel (%p242) target = $region16
        $region15: #{tpu_custom_call.1} parent=11 // pred_region
          %p245 = scmp.lt.s32.totalorder %s35, 0
          %s246 = scalar_select %p245, %s35, 0
          %s247 = smul.addr %s246, 2
          %s248 = scalar_lea.vmem %s3, %s247
        $region16: #{tpu_custom_call.1} parent=11 // pred_fallthru
          _
      $region12: #{tpu_custom_call.1} parent=5 // pred_fallthru
        _
      %p249 = scmp.lt.s32.totalorder %s25, 2
      // Predicated region
      $region17: #{tpu_custom_call.1} parent=5 // pred_check
        %p250 = pneg %p249
      $region18: #{tpu_custom_call.1} parent=5 // pred_check_branch
        %252 = sbr.rel (%p250) target = $region20
      $region19: #{tpu_custom_call.1} parent=5 // pred_region
        // Predicated region
        $region21: #{tpu_custom_call.1} parent=19 // pred_check
          %p253 = pneg %p59
        $region22: #{tpu_custom_call.1} parent=19 // pred_check_branch
          %255 = sbr.rel (%p253) target = $region24
        $region23: #{tpu_custom_call.1} parent=19 // pred_region
          %p256 = scmp.lt.s32.totalorder %s32, 1
          %s257 = scalar_select %p256, %s32, 1
          %p258 = scmp.lt.s32.totalorder %s33, 0
          %s259 = scalar_select %p258, %s33, 0
          %s260 = sadd.s32 %s259, %s257
          %s261 = smul.addr %s260, 8
          %s262 = scalar_lea.vmem %s0, %s261
        $region24: #{tpu_custom_call.1} parent=19 // pred_fallthru
          _
        // Predicated region
        $region25: #{tpu_custom_call.1} parent=19 // pred_check
          %p263 = pneg %p85
        $region26: #{tpu_custom_call.1} parent=19 // pred_check_branch
          %265 = sbr.rel (%p263) target = $region28
        $region27: #{tpu_custom_call.1} parent=19 // pred_region
          %s266 = sand.u32 %s75, 1
          %s267 = scalar_lea.sflag [#allocation3], %s266
          %s268 = sand.u32 %s75, 1
          %s269 = smul.addr %s268, 8
          %s270 = scalar_lea.vmem [#allocation2], %s269
          %s272 = ssub.s32 128, 128
          %273 = vsyncadd %s267, %s272
          %s274 = smul.addr %s32, 128
          %s275 = scalar_lea.hbm %s1, %s274
          %s277 = sshll.u32 %s270, 4
          %s278 = int_to_ptr.vmem [resolvable:$true] %s277
          %280 = dma.hbm_to_vmem [thread:$0]  %s275, 128, %s278, %s267
        $region28: #{tpu_custom_call.1} parent=19 // pred_fallthru
          _
        // Predicated region
        $region29: #{tpu_custom_call.1} parent=19 // pred_check
          %p281 = pneg %p111
        $region30: #{tpu_custom_call.1} parent=19 // pred_check_branch
          %283 = sbr.rel (%p281) target = $region32
        $region31: #{tpu_custom_call.1} parent=19 // pred_region
          %s284 = sand.u32 %s101, 1
          %s285 = scalar_lea.sflag [#allocation6], %s284
          %s286 = sand.u32 %s101, 1
          %s287 = smul.addr %s286, 8
          %s288 = scalar_lea.vmem [#allocation5], %s287
          %s290 = ssub.s32 128, 128
          %291 = vsyncadd %s285, %s290
          %s292 = smul.addr %s32, 128
          %s293 = scalar_lea.hbm %s2, %s292
          %s295 = sshll.u32 %s288, 4
          %s296 = int_to_ptr.vmem [resolvable:$true] %s295
          %298 = dma.hbm_to_vmem [thread:$0]  %s293, 128, %s296, %s285
        $region32: #{tpu_custom_call.1} parent=19 // pred_fallthru
          _
        // Predicated region
        $region33: #{tpu_custom_call.1} parent=19 // pred_check
          %p299 = pneg %p165
        $region34: #{tpu_custom_call.1} parent=19 // pred_check_branch
          %301 = sbr.rel (%p299) target = $region36
        $region35: #{tpu_custom_call.1} parent=19 // pred_region
          %p302 = scmp.lt.s32.totalorder %s32, 1
          %s303 = scalar_select %p302, %s32, 1
          %p304 = scmp.lt.s32.totalorder %s33, 0
          %s305 = scalar_select %p304, %s33, 0
          %s306 = sadd.s32 %s305, %s303
          %s307 = smul.addr %s306, 8
          %s308 = scalar_lea.vmem %s4, %s307
        $region36: #{tpu_custom_call.1} parent=19 // pred_fallthru
          _
      $region20: #{tpu_custom_call.1} parent=5 // pred_fallthru
        _
      %p309 = scmp.le.s32.totalorder 1, %s25
      %p310 = scmp.lt.s32.totalorder %s25, 3
      %p311 = pnand %p309, %p310
      %p312 = pneg %p311
      // Predicated region
      $region37: #{tpu_custom_call.1} parent=5 // pred_check
        _
      $region38: #{tpu_custom_call.1} parent=5 // pred_check_branch
        %314 = sbr.rel (%p311) target = $region40
      $region39: #{tpu_custom_call.1} parent=5 // pred_region
        %s315 = ssub.s32 %s25, 1
        %s316 = sand.u32 %s78, 1
        %s317 = scalar_lea.sflag [#allocation3], %s316
        %s318 = sand.u32 %s78, 1
        %s319 = smul.addr %s318, 8
        %s320 = scalar_lea.vmem [#allocation2], %s319
        // Predicated region
        $region41: #{tpu_custom_call.1} parent=39 // pred_check
          %p321 = pneg %p91
        $region42: #{tpu_custom_call.1} parent=39 // pred_check_branch
          %323 = sbr.rel (%p321) target = $region44
        $region43: #{tpu_custom_call.1} parent=39 // pred_region
          %324 = dma.done %s317, 128
        $region44: #{tpu_custom_call.1} parent=39 // pred_fallthru
          _
        %s325 = sand.u32 %s104, 1
        %s326 = scalar_lea.sflag [#allocation6], %s325
        %s327 = sand.u32 %s104, 1
        %s328 = smul.addr %s327, 8
        %s329 = scalar_lea.vmem [#allocation5], %s328
        // Predicated region
        $region45: #{tpu_custom_call.1} parent=39 // pred_check
          %p330 = pneg %p117
        $region46: #{tpu_custom_call.1} parent=39 // pred_check_branch
          %332 = sbr.rel (%p330) target = $region48
        $region47: #{tpu_custom_call.1} parent=39 // pred_region
          %333 = dma.done %s326, 128
        $region48: #{tpu_custom_call.1} parent=39 // pred_fallthru
          _
        %p334 = scmp.lt.s32.totalorder %s34, 1
        %s335 = scalar_select %p334, %s34, 1
        %p336 = scmp.lt.s32.totalorder %s35, 0
        %s337 = scalar_select %p336, %s35, 0
        %s338 = sadd.s32 %s337, %s335
        %s339 = smul.addr %s338, 8
        %s340 = scalar_lea.vmem %s0, %s339
        %p341 = pneg %p65
        %p342 = pneg %p62
        %s343 = sand.u32 %s78, 1
        %s344 = scalar_lea.sflag [#allocation3], %s343
        %s345 = sand.u32 %s78, 1
        %s346 = smul.addr %s345, 8
        %s347 = scalar_lea.vmem [#allocation2], %s346
        %p348 = pneg %p91
        %p349 = pneg %p88
        %s350 = sand.u32 %s104, 1
        %s351 = scalar_lea.sflag [#allocation6], %s350
        %s352 = sand.u32 %s104, 1
        %s353 = smul.addr %s352, 8
        %s354 = scalar_lea.vmem [#allocation5], %s353
        %p355 = pneg %p117
        %p356 = pneg %p114
        %p357 = scmp.lt.s32.totalorder %s35, 0
        %s358 = scalar_select %p357, %s35, 0
        %s359 = smul.addr %s358, 2
        %s360 = scalar_lea.vmem %s3, %s359
        %p361 = pneg %p143
        %p362 = pneg %p140
        %p363 = scmp.lt.s32.totalorder %s34, 1
        %s364 = scalar_select %p363, %s34, 1
        %p365 = scmp.lt.s32.totalorder %s35, 0
        %s366 = scalar_select %p365, %s35, 0
        %s367 = sadd.s32 %s366, %s364
        %s368 = smul.addr %s367, 8
        %s369 = scalar_lea.vmem %s4, %s368
        %p370 = pneg %p171
        %p371 = pneg %p168
        %p372 = pneg %p199
        %p373 = pneg %p196
        %s374 = sand.u32 %s186, 1
        %s375 = scalar_lea.sflag [#allocation4], %s374
        %s376 = sand.u32 %s186, 1
        %s377 = smul.addr %s376, 8
        %s378 = scalar_lea.vmem [#allocation7], %s377
        %p379 = pneg %p227
        %p380 = pneg %p224
        %s381 = sand.u32 %s214, 1
        %s382 = scalar_lea.sflag [#allocation9], %s381
        %s383 = sand.u32 %s214, 1
        %s384 = smul.addr %s383, 8
        %s385 = scalar_lea.vmem [#allocation8], %s384
        %p386 = scmp.lt.s32.totalorder %s34, 1
        %s387 = scalar_select %p386, %s34, 1
        %p388 = scmp.lt.s32.totalorder %s35, 0
        %s389 = scalar_select %p388, %s35, 0
        %s390 = sadd.s32 %s389, %s387
        %s391 = smul.addr %s390, 8
        %s392 = scalar_lea.vmem %s0, %s391
        %p393 = scmp.lt.s32.totalorder %s35, 0
        %s394 = scalar_select %p393, %s35, 0
        %s395 = smul.addr %s394, 2
        %s396 = scalar_lea.vmem %s3, %s395
        %p397 = scmp.lt.s32.totalorder %s34, 1
        %s398 = scalar_select %p397, %s34, 1
        %p399 = scmp.lt.s32.totalorder %s35, 0
        %s400 = scalar_select %p399, %s35, 0
        %s401 = sadd.s32 %s400, %s398
        %s402 = smul.addr %s401, 8
        %s403 = scalar_lea.vmem %s4, %s402
        %v407 = vld [vmem:[%s392] sm:$0xff]
        %v408 = vmul.f32 %v407, 0.17677669
        %v409 = vpack.c.bf16 %v408, %v408
        %v410 = vld [vmem:[%s320] sm:$0xff]
        %v411 = vpack.c.bf16 %v410, %v410
        %vm412 = vcmask 261120
        %v414 = vsel %vm412, %v409, 0
        %v417 = vsel %vm412, %v411, 0
        %419 = vmatprep.subr.bf16.mxu0 0
        %420 = vmatpush1.bf16.xpose.msra.mxu0 0
        %421 = vmatprep.subr.bf16.mxu0 0
        %422 = vmatpush1.bf16.xpose.msra.mxu0 0
        %423 = vmatprep.subr.bf16.mxu0 0
        %424 = vmatpush1.bf16.xpose.msra.mxu0 0
        %425 = vmatprep.subr.bf16.mxu0 0
        %426 = vmatpush1.bf16.xpose.msra.mxu0 0
        %427 = vmatprep.subr.bf16.mxu0 0
        %428 = vmatpush1.bf16.xpose.msra.mxu0 0
        %429 = vmatprep.subr.bf16.mxu0 0
        %430 = vmatpush1.bf16.xpose.msra.mxu0 0
        %431 = vmatprep.subr.bf16.mxu0 0
        %432 = vmatpush1.bf16.xpose.msra.mxu0 0
        %433 = vmatprep.subr.bf16.mxu0 0
        %434 = vmatpush1.bf16.xpose.msra.mxu0 %v417
        %435 = vmatprep.subr.bf16.mxu0 0
        %436 = vmatpush2.bf16.xpose.msra.mxu0 0
        %437 = vmatprep.subr.bf16.mxu0 0
        %438 = vmatpush2.bf16.xpose.msra.mxu0 0
        %439 = vmatprep.subr.bf16.mxu0 0
        %440 = vmatpush2.bf16.xpose.msra.mxu0 0
        %441 = vmatprep.subr.bf16.mxu0 0
        %442 = vmatpush2.bf16.xpose.msra.mxu0 0
        %443 = vmatprep.subr.bf16.mxu0 0
        %444 = vmatpush2.bf16.xpose.msra.mxu0 0
        %445 = vmatprep.subr.bf16.mxu0 0
        %446 = vmatpush2.bf16.xpose.msra.mxu0 0
        %447 = vmatprep.subr.bf16.mxu0 0
        %448 = vmatpush2.bf16.xpose.msra.mxu0 0
        %449 = vmatprep.subr.bf16.mxu0 0
        %450 = vmatpush2.bf16.xpose.msra.mxu0 0
        %451 = vmatprep.mubr.bf16.mxu0 0
        %452 = vmatmul.mubr.bf16.gmra.mxu0 %v414
        %v453 = vpop.f32.mrf.mxu0
        %v454 = vadd.f32 0.0, %v453
        %v455 = vpop.f32.mrf.mxu0
        %v456 = vpop.f32.mrf.mxu0
        %v457 = vpop.f32.mrf.mxu0
        %458 = vdwg.mxu0
        %v459 = vld [vmem:[%s396] sm:$0x3]
        %vm460 = vnez %v459
        %v461 = vsel %vm460, 16843009, 0
        %v462 = vunpack.c.0.s8 %v461
        %vm463 = vcmp.ne.s32.totalorder %v462, 0
        %v464 = vsel %vm463, -1e+18, %v454
        %v465 = vld [vmem:[%s403] sm:$0xff]
        %vm466 = vcmp.ne.f32.partialorder %v465, 0.0
        %v467 = vsel %vm466, 1, 0
        %468 = vset.pattern.permute.xlu0 0
        %469 = vperm.xlu0 %468, %v467
        %v470 = vpop.permute.xlu0 %469
        %vm471 = vcmp.eq.s32.totalorder %v470, 1
        %v472 = vsel %vm471, -1e+18, %v464
        %vm473 = vcmask 64512
        %v474 = vsel %vm473, %v472, -inf
        %475 = vmax.xlane.f32.xlu0 %v474
        %v476 = vpop.xlane.xlu0 %475
        %v477 = vsub.f32 %v472, %v476
        %v478 = vmul.f32 %v477, 1.442695
        %v479 = vpow.pop %v478
        %v480 = vsel %vm473, %v479, 0.0
        %481 = vadd.xlane.f32.xlu0 %v480
        %v482 = vpop.xlane.xlu0 %481
        %v483 = vrcp.pop %v482
        %v484 = vmul.f32 1.0, %v483
        %v485 = vmul.f32 %v479, %v484
        %486 = vst.msk [vmem:[%s385] sm:$0xff] %vm473, %v485
        %v487 = vpack.c.bf16 %v485, %v485
        %v488 = vld [vmem:[%s329] sm:$0xff]
        %v489 = vpack.c.bf16 %v488, %v488
        %v491 = vsel %vm473, %v487, 0
        %vm493 = vcmask 1043456
        %v495 = vsel %vm493, %v489, 0
        %497 = vmatprep.subr.bf16.mxu0 0
        %498 = vmatpush1.bf16.msra.mxu0 0
        %499 = vmatprep.subr.bf16.mxu0 0
        %500 = vmatpush1.bf16.msra.mxu0 0
        %501 = vmatprep.subr.bf16.mxu0 0
        %502 = vmatpush1.bf16.msra.mxu0 0
        %503 = vmatprep.subr.bf16.mxu0 0
        %504 = vmatpush1.bf16.msra.mxu0 0
        %505 = vmatprep.subr.bf16.mxu0 0
        %506 = vmatpush1.bf16.msra.mxu0 0
        %507 = vmatprep.subr.bf16.mxu0 0
        %508 = vmatpush1.bf16.msra.mxu0 0
        %509 = vmatprep.subr.bf16.mxu0 0
        %510 = vmatpush1.bf16.msra.mxu0 0
        %511 = vmatprep.subr.bf16.mxu0 0
        %512 = vmatpush1.bf16.msra.mxu0 %v495
        %513 = vmatprep.subr.bf16.mxu0 0
        %514 = vmatpush2.bf16.msra.mxu0 0
        %515 = vmatprep.subr.bf16.mxu0 0
        %516 = vmatpush2.bf16.msra.mxu0 0
        %517 = vmatprep.subr.bf16.mxu0 0
        %518 = vmatpush2.bf16.msra.mxu0 0
        %519 = vmatprep.subr.bf16.mxu0 0
        %520 = vmatpush2.bf16.msra.mxu0 0
        %521 = vmatprep.subr.bf16.mxu0 0
        %522 = vmatpush2.bf16.msra.mxu0 0
        %523 = vmatprep.subr.bf16.mxu0 0
        %524 = vmatpush2.bf16.msra.mxu0 0
        %525 = vmatprep.subr.bf16.mxu0 0
        %526 = vmatpush2.bf16.msra.mxu0 0
        %527 = vmatprep.subr.bf16.mxu0 0
        %528 = vmatpush2.bf16.msra.mxu0 0
        %529 = vmatprep.mubr.bf16.mxu0 0
        %530 = vmatmul.mubr.bf16.gmra.mxu0 %v491
        %v531 = vpop.f32.mrf.mxu0
        %v532 = vadd.f32 0.0, %v531
        %v533 = vpop.f32.mrf.mxu0
        %v534 = vpop.f32.mrf.mxu0
        %v535 = vpop.f32.mrf.mxu0
        %536 = vdwg.mxu0
        %537 = vst.msk [vmem:[%s378] sm:$0xff] %vm412, %v532
        %s538 = sand.u32 %s186, 1
        %s539 = scalar_lea.sflag [#allocation4], %s538
        %s540 = sand.u32 %s186, 1
        %s541 = smul.addr %s540, 8
        %s542 = scalar_lea.vmem [#allocation7], %s541
        %s543 = sand.u32 %s214, 1
        %s544 = scalar_lea.sflag [#allocation9], %s543
        %s545 = sand.u32 %s214, 1
        %s546 = smul.addr %s545, 8
        %s547 = scalar_lea.vmem [#allocation8], %s546
        // Predicated region
        $region49: #{tpu_custom_call.1} parent=39 // pred_check
          %p548 = pneg %p196
        $region50: #{tpu_custom_call.1} parent=39 // pred_check_branch
          %550 = sbr.rel (%p548) target = $region52
        $region51: #{tpu_custom_call.1} parent=39 // pred_region
          %s552 = ssub.s32 128, 128
          %553 = vsyncadd %s539, %s552
          %s554 = sadd.s32 %s35, %s34
          %s555 = smul.addr %s554, 128
          %s556 = scalar_lea.hbm %s5, %s555
          %s558 = sshll.u32 %s542, 4
          %s559 = int_to_ptr.vmem [resolvable:$true] %s558
          %561 = dma.vmem_to_hbm [thread:$0]  %s559, 128, %s556, %s539
        $region52: #{tpu_custom_call.1} parent=39 // pred_fallthru
          _
        // Predicated region
        $region53: #{tpu_custom_call.1} parent=39 // pred_check
          %p562 = pneg %p224
        $region54: #{tpu_custom_call.1} parent=39 // pred_check_branch
          %564 = sbr.rel (%p562) target = $region56
        $region55: #{tpu_custom_call.1} parent=39 // pred_region
          %s566 = ssub.s32 128, 128
          %567 = vsyncadd %s544, %s566
          %s568 = sadd.s32 %s35, %s34
          %s569 = smul.addr %s568, 128
          %s570 = scalar_lea.hbm %s6, %s569
          %s572 = sshll.u32 %s547, 4
          %s573 = int_to_ptr.vmem [resolvable:$true] %s572
          %575 = dma.vmem_to_hbm [thread:$0]  %s573, 128, %s570, %s544
        $region56: #{tpu_custom_call.1} parent=39 // pred_fallthru
          _
      $region40: #{tpu_custom_call.1} parent=5 // pred_fallthru
        _
      %p576 = scmp.le.s32.totalorder 2, %s25
      // Predicated region
      $region57: #{tpu_custom_call.1} parent=5 // pred_check
        %p577 = pneg %p576
      $region58: #{tpu_custom_call.1} parent=5 // pred_check_branch
        %579 = sbr.rel (%p577) target = $region60
      $region59: #{tpu_custom_call.1} parent=5 // pred_region
        %s580 = ssub.s32 %s25, 2
        // Predicated region
        $region61: #{tpu_custom_call.1} parent=59 // pred_check
          %p581 = pneg %p202
        $region62: #{tpu_custom_call.1} parent=59 // pred_check_branch
          %583 = sbr.rel (%p581) target = $region64
        $region63: #{tpu_custom_call.1} parent=59 // pred_region
          %s584 = sand.u32 %s187, 1
          %s585 = scalar_lea.sflag [#allocation4], %s584
          %s586 = sand.u32 %s187, 1
          %s587 = smul.addr %s586, 8
          %s588 = scalar_lea.vmem [#allocation7], %s587
          %589 = dma.done %s585, 128
        $region64: #{tpu_custom_call.1} parent=59 // pred_fallthru
          _
        // Predicated region
        $region65: #{tpu_custom_call.1} parent=59 // pred_check
          %p590 = pneg %p230
        $region66: #{tpu_custom_call.1} parent=59 // pred_check_branch
          %592 = sbr.rel (%p590) target = $region68
        $region67: #{tpu_custom_call.1} parent=59 // pred_region
          %s593 = sand.u32 %s215, 1
          %s594 = scalar_lea.sflag [#allocation9], %s593
          %s595 = sand.u32 %s215, 1
          %s596 = smul.addr %s595, 8
          %s597 = scalar_lea.vmem [#allocation8], %s596
          %598 = dma.done %s594, 128
        $region68: #{tpu_custom_call.1} parent=59 // pred_fallthru
          _
      $region60: #{tpu_custom_call.1} parent=5 // pred_fallthru
        _
    $region6: #{tpu_custom_call.1} parent=1 // loop_footer
      %s29 = sadd.s32 1, %s25
    $region7: #{tpu_custom_call.1} parent=1 // loop_footer_branch
      %24 = sbr.rel target = $region3
    $region8: #{tpu_custom_call.1} parent=1 // loop_exit
      _
    %599 = vsyncpa [#allocation3], 1
    %s600 = scalar_lea.sflag [#allocation3], 1
    %601 = vsyncpa %s600, 1
    %602 = vsyncpa [#allocation6], 1
    %s603 = scalar_lea.sflag [#allocation6], 1
    %604 = vsyncpa %s603, 1
    %605 = vsyncpa [#allocation4], 1
    %s606 = scalar_lea.sflag [#allocation4], 1
    %607 = vsyncpa %s606, 1
    %608 = vsyncpa [#allocation9], 1
    %s609 = scalar_lea.sflag [#allocation9], 1
    %610 = vsyncpa %s609, 1

</llo_original>
